<compile_context>
chip_gen: v6e
topology: v6e:2x2x1
jax: 0.10.0
libtpu: 0.0.40
codegen_flags: <defaults>
</compile_context>

<pallas_src>
import functools

import jax
import jax.numpy as jnp
from jax import lax
from jax.experimental import pallas as pl
from jax.experimental.pallas import tpu as pltpu


def _ingred_bilstm_last_kernel(x_ref,                         # [T*B, E]  time-major flat
                               wih_f_ref, whh_f_ref, b_f_ref, # [E,4H], [H,4H], [1,4H]
                               wih_b_ref, b_b_ref,            # reverse dir ([E,4H],[1,4H])
                               out_ref):                      # [B, 2H]
    B = out_ref.shape[0]
    H = whh_f_ref.shape[0]
    T = x_ref.shape[0] // B

    x = x_ref[...]                                            # [T*B, E]
    whh_f = whh_f_ref[...]                                    # [H, 4H]

    # ---- Input projection hoisted out of the recurrence: one GEMM + one bias add ----
    gates_in = (jnp.dot(x, wih_f_ref[...], preferred_element_type=jnp.float32)
                + b_f_ref[...])                               # [T*B, 4H]

    # ---- Forward recurrence: unrolled, only h @ W_hh left on the serial chain ----
    h = jnp.zeros((B, H), jnp.float32)
    c = jnp.zeros((B, H), jnp.float32)
    for t in range(T):                                        # T is small & static
        gates = gates_in[t * B:(t + 1) * B, :] + jnp.dot(
            h, whh_f, preferred_element_type=jnp.float32)     # [B, 4H]
        sig = jax.nn.sigmoid(gates)        # one EUP pass over the whole 4H-wide vreg
        th = jnp.tanh(gates)               # one EUP pass over the whole 4H-wide vreg
        i_g = sig[:, 0 * H:1 * H]
        f_g = sig[:, 1 * H:2 * H]
        g_g = th[:, 2 * H:3 * H]
        o_g = sig[:, 3 * H:4 * H]
        c = f_g * c + i_g * g_g
        h = o_g * jnp.tanh(c)

    # ---- Reverse direction: output[:, -1, H:] is the reverse LSTM's first step,
    #      i.e. one cell update on x[T-1] from zero state (h0 = c0 = 0). ----
    x_last = x[(T - 1) * B:, :]                               # [B, E]
    gates_b = (jnp.dot(x_last, wih_b_ref[...], preferred_element_type=jnp.float32)
               + b_b_ref[...])                                # h0 @ W_hh_b == 0, skipped
    sig_b = jax.nn.sigmoid(gates_b)
    th_b = jnp.tanh(gates_b)
    c_b = sig_b[:, 0 * H:1 * H] * th_b[:, 2 * H:3 * H]        # i * g   (f * c0 == 0)
    h_b = sig_b[:, 3 * H:4 * H] * jnp.tanh(c_b)               # o * tanh(c)

    out_ref[...] = jnp.concatenate([h, h_b], axis=-1)         # [B, 2H]


def bilstm_last_pallas(x_tm_flat, wih_f, whh_f, b_f, wih_b, b_b, batch):
    """x_tm_flat: [T*B, E] f32 time-major-flattened embedded input. Returns [B, 2H]."""
    H = whh_f.shape[0]
    vmem = pl.BlockSpec(memory_space=pltpu.MemorySpace.VMEM)
    return pl.pallas_call(
        _ingred_bilstm_last_kernel,
        out_shape=jax.ShapeDtypeStruct((batch, 2 * H), jnp.float32),
        in_specs=[vmem] * 6,
        out_specs=vmem,
    )(x_tm_flat, wih_f, whh_f, b_f, wih_b, b_b)


@jax.jit
def _forward_impl(tokens, emb, wih_f, whh_f, b_f, wih_b, b_b):
    B, T = tokens.shape
    # Gather the embedding directly in time-major order (no [B,T,E] transpose pass).
    tok_tm = jnp.transpose(tokens, (1, 0)).reshape(-1)        # [T*B] int32 (tiny)
    x_tm = jnp.take(emb, tok_tm, axis=0)                      # [T*B, E]
    return bilstm_last_pallas(x_tm, wih_f, whh_f, b_f, wih_b, b_b, B)


def ingred_model_forward(data, params):
    """Equivalent of IngredModel.forward for the 'base' LSTM variant.

    data[3]: int32 token ids [B, T]; data[4]: seq lengths [B] (unused in 'base').
    Returns [B, 2*H] = bidirectional LSTM output at the last timestep.
    """
    tokens = data[3]
    return _forward_impl(tokens, params["emb"],
                         params["wih_f"], params["whh_f"], params["b_f"],
                         params["wih_b"], params["b_b"])


def init_params(key, vocab, emb_dim, hidden):
    """Deterministic parameter init (stands in for word2vec vectors + LSTM params)."""
    ks = jax.random.split(key, 9)
    scale = 1.0 / jnp.sqrt(hidden)
    u = lambda k, shp: jax.random.uniform(k, shp, jnp.float32, -scale, scale)
    params = dict(
        emb=jax.random.normal(ks[0], (vocab, emb_dim), jnp.float32),
        # Stored transposed relative to PyTorch ([4H,E] -> [E,4H]) so kernel does x @ W.
        wih_f=u(ks[1], (emb_dim, 4 * hidden)),
        whh_f=u(ks[2], (hidden, 4 * hidden)),
        b_f=(u(ks[3], (1, 4 * hidden)) + u(ks[4], (1, 4 * hidden))),  # b_ih + b_hh
        wih_b=u(ks[5], (emb_dim, 4 * hidden)),
        # whh_b is part of the PyTorch parameterization but never multiplies a nonzero
        # hidden state for output[:, -1, :] (reverse dir's first step) -> unused here.
        whh_b=u(ks[6], (hidden, 4 * hidden)),
        b_b=(u(ks[7], (1, 4 * hidden)) + u(ks[8], (1, 4 * hidden))),
    )
    return params


def _reference_forward(tokens, params):
    """Pure-JAX BiLSTM (full sequence, PyTorch alignment), then output[:, -1, :]."""
    embedded = jnp.take(params["emb"], tokens, axis=0)        # [B, T, E]
    B, T, _ = embedded.shape
    H = params["whh_f"].shape[0]
    hi = lax.Precision.HIGHEST

    def cell(carry, xt, wih, whh, b):
        h, c = carry
        gates = (jnp.dot(xt, wih, precision=hi)
                 + jnp.dot(h, whh, precision=hi) + b)
        i = jax.nn.sigmoid(gates[:, 0 * H:1 * H])
        f = jax.nn.sigmoid(gates[:, 1 * H:2 * H])
        g = jnp.tanh(gates[:, 2 * H:3 * H])
        o = jax.nn.sigmoid(gates[:, 3 * H:4 * H])
        c = f * c + i * g
        h = o * jnp.tanh(c)
        return (h, c), h

    x_tm = jnp.transpose(embedded, (1, 0, 2))                 # [T, B, E]
    init = (jnp.zeros((B, H), jnp.float32), jnp.zeros((B, H), jnp.float32))
    _, hs_f = lax.scan(lambda cy, xt: cell(cy, xt, params["wih_f"],
                                           params["whh_f"], params["b_f"]), init, x_tm)
    _, hs_b = lax.scan(lambda cy, xt: cell(cy, xt, params["wih_b"],
                                           params["whh_b"], params["b_b"]),
                       init, x_tm[::-1])
    out_seq = jnp.concatenate([hs_f, hs_b[::-1]], axis=-1)    # [T, B, 2H], PyTorch align
    return out_seq[-1]                                        # == output[:, -1, :]


if __name__ == "__main__":
    B, T, V = 2, 8, 16
    EMB_DIM = 32      # args.ingredient_embedding_dim
    HIDDEN = 32       # args.ingredient_lstm_dim

    key = jax.random.PRNGKey(0)
    k_param, k_tok = jax.random.split(key)
    params = init_params(k_param, V, EMB_DIM, HIDDEN)

    tokens = jax.random.randint(k_tok, (B, T), 0, V, dtype=jnp.int32)
    seq_len = jnp.full((B,), T, dtype=jnp.int32)
    data = (None, None, None, tokens, seq_len)   # mirrors data[3], data[4] usage

    out = ingred_model_forward(data, params)
    out = jax.block_until_ready(out)
    assert out.shape == (B, 2 * HIDDEN), out.shape

    ref = jax.block_until_ready(_reference_forward(tokens, params))
    assert jnp.all(jnp.isfinite(out))
    assert jnp.allclose(out, ref, atol=1e-2, rtol=1e-2), float(jnp.max(jnp.abs(out - ref)))

    print("KERNEL_OK")
</pallas_src>

<mosaic_0001>
module attributes {stable_mosaic.version = 11 : i64} {
  func.func @_ingred_bilstm_last_kernel(%arg0: memref<16x32xf32, #tpu.memory_space<vmem>>, %arg1: memref<32x128xf32, #tpu.memory_space<vmem>>, %arg2: memref<32x128xf32, #tpu.memory_space<vmem>>, %arg3: memref<1x128xf32, #tpu.memory_space<vmem>>, %arg4: memref<32x128xf32, #tpu.memory_space<vmem>>, %arg5: memref<1x128xf32, #tpu.memory_space<vmem>>, %arg6: memref<2x64xf32, #tpu.memory_space<vmem>>) attributes {dimension_semantics = [], scalar_prefetch = 0 : i64, scratch_operands = 0 : i64, tpu.core_type = #tpu.core_type<tc>} {
    %c0 = arith.constant 0 : index
    %c0_0 = arith.constant 0 : index
    %0 = vector.load %arg0[%c0, %c0_0] : memref<16x32xf32, #tpu.memory_space<vmem>>, vector<16x32xf32>
    %c0_1 = arith.constant 0 : index
    %c0_2 = arith.constant 0 : index
    %1 = vector.load %arg2[%c0_1, %c0_2] : memref<32x128xf32, #tpu.memory_space<vmem>>, vector<32x128xf32>
    %c0_3 = arith.constant 0 : index
    %c0_4 = arith.constant 0 : index
    %2 = vector.load %arg1[%c0_3, %c0_4] : memref<32x128xf32, #tpu.memory_space<vmem>>, vector<32x128xf32>
    %cst = arith.constant dense<0.000000e+00> : vector<16x128xf32>
    %3 = tpu.matmul %0, %2, %cst {dimension_numbers = #tpu.dot_dimension_numbers<[1], [0], [0], [1], [0, 0, 1, 1], [], []>} : vector<16x32xf32>, vector<32x128xf32>, vector<16x128xf32> -> vector<16x128xf32>
    %c0_5 = arith.constant 0 : index
    %c0_6 = arith.constant 0 : index
    %4 = vector.load %arg3[%c0_5, %c0_6] : memref<1x128xf32, #tpu.memory_space<vmem>>, vector<1x128xf32>
    %5 = vector.broadcast %4 : vector<1x128xf32> to vector<16x128xf32>
    %6 = arith.addf %3, %5 : vector<16x128xf32>
    %cst_7 = arith.constant 0.000000e+00 : f32
    %7 = vector.broadcast %cst_7 : f32 to vector<2x32xf32>
    %cst_8 = arith.constant 0.000000e+00 : f32
    %8 = vector.broadcast %cst_8 : f32 to vector<2x32xf32>
    %9 = vector.extract_strided_slice %6 {offsets = [0, 0], sizes = [2, 128], strides = [1, 1]} : vector<16x128xf32> to vector<2x128xf32>
    %cst_9 = arith.constant dense<0.000000e+00> : vector<2x128xf32>
    %10 = tpu.matmul %7, %1, %cst_9 {dimension_numbers = #tpu.dot_dimension_numbers<[1], [0], [0], [1], [0, 0, 1, 1], [], []>} : vector<2x32xf32>, vector<32x128xf32>, vector<2x128xf32> -> vector<2x128xf32>
    %11 = arith.addf %9, %10 : vector<2x128xf32>
    %12 = arith.negf %11 : vector<2x128xf32>
    %13 = math.exp %12 : vector<2x128xf32>
    %cst_10 = arith.constant 1.000000e+00 : f32
    %14 = vector.broadcast %cst_10 : f32 to vector<2x128xf32>
    %15 = arith.addf %14, %13 : vector<2x128xf32>
    %16 = arith.divf %14, %15 : vector<2x128xf32>
    %17 = math.tanh %11 : vector<2x128xf32>
    %18 = vector.extract_strided_slice %16 {offsets = [0, 0], sizes = [2, 32], strides = [1, 1]} : vector<2x128xf32> to vector<2x32xf32>
    %19 = vector.extract_strided_slice %16 {offsets = [0, 32], sizes = [2, 32], strides = [1, 1]} : vector<2x128xf32> to vector<2x32xf32>
    %20 = vector.extract_strided_slice %17 {offsets = [0, 64], sizes = [2, 32], strides = [1, 1]} : vector<2x128xf32> to vector<2x32xf32>
    %21 = vector.extract_strided_slice %16 {offsets = [0, 96], sizes = [2, 32], strides = [1, 1]} : vector<2x128xf32> to vector<2x32xf32>
    %22 = arith.mulf %19, %8 : vector<2x32xf32>
    %23 = arith.mulf %18, %20 : vector<2x32xf32>
    %24 = arith.addf %22, %23 : vector<2x32xf32>
    %25 = math.tanh %24 : vector<2x32xf32>
    %26 = arith.mulf %21, %25 : vector<2x32xf32>
    %27 = vector.extract_strided_slice %6 {offsets = [2, 0], sizes = [2, 128], strides = [1, 1]} : vector<16x128xf32> to vector<2x128xf32>
    %cst_11 = arith.constant dense<0.000000e+00> : vector<2x128xf32>
    %28 = tpu.matmul %26, %1, %cst_11 {dimension_numbers = #tpu.dot_dimension_numbers<[1], [0], [0], [1], [0, 0, 1, 1], [], []>} : vector<2x32xf32>, vector<32x128xf32>, vector<2x128xf32> -> vector<2x128xf32>
    %29 = arith.addf %27, %28 : vector<2x128xf32>
    %30 = arith.negf %29 : vector<2x128xf32>
    %31 = math.exp %30 : vector<2x128xf32>
    %cst_12 = arith.constant 1.000000e+00 : f32
    %32 = vector.broadcast %cst_12 : f32 to vector<2x128xf32>
    %33 = arith.addf %32, %31 : vector<2x128xf32>
    %34 = arith.divf %32, %33 : vector<2x128xf32>
    %35 = math.tanh %29 : vector<2x128xf32>
    %36 = vector.extract_strided_slice %34 {offsets = [0, 0], sizes = [2, 32], strides = [1, 1]} : vector<2x128xf32> to vector<2x32xf32>
    %37 = vector.extract_strided_slice %34 {offsets = [0, 32], sizes = [2, 32], strides = [1, 1]} : vector<2x128xf32> to vector<2x32xf32>
    %38 = vector.extract_strided_slice %35 {offsets = [0, 64], sizes = [2, 32], strides = [1, 1]} : vector<2x128xf32> to vector<2x32xf32>
    %39 = vector.extract_strided_slice %34 {offsets = [0, 96], sizes = [2, 32], strides = [1, 1]} : vector<2x128xf32> to vector<2x32xf32>
    %40 = arith.mulf %37, %24 : vector<2x32xf32>
    %41 = arith.mulf %36, %38 : vector<2x32xf32>
    %42 = arith.addf %40, %41 : vector<2x32xf32>
    %43 = math.tanh %42 : vector<2x32xf32>
    %44 = arith.mulf %39, %43 : vector<2x32xf32>
    %45 = vector.extract_strided_slice %6 {offsets = [4, 0], sizes = [2, 128], strides = [1, 1]} : vector<16x128xf32> to vector<2x128xf32>
    %cst_13 = arith.constant dense<0.000000e+00> : vector<2x128xf32>
    %46 = tpu.matmul %44, %1, %cst_13 {dimension_numbers = #tpu.dot_dimension_numbers<[1], [0], [0], [1], [0, 0, 1, 1], [], []>} : vector<2x32xf32>, vector<32x128xf32>, vector<2x128xf32> -> vector<2x128xf32>
    %47 = arith.addf %45, %46 : vector<2x128xf32>
    %48 = arith.negf %47 : vector<2x128xf32>
    %49 = math.exp %48 : vector<2x128xf32>
    %cst_14 = arith.constant 1.000000e+00 : f32
    %50 = vector.broadcast %cst_14 : f32 to vector<2x128xf32>
    %51 = arith.addf %50, %49 : vector<2x128xf32>
    %52 = arith.divf %50, %51 : vector<2x128xf32>
    %53 = math.tanh %47 : vector<2x128xf32>
    %54 = vector.extract_strided_slice %52 {offsets = [0, 0], sizes = [2, 32], strides = [1, 1]} : vector<2x128xf32> to vector<2x32xf32>
    %55 = vector.extract_strided_slice %52 {offsets = [0, 32], sizes = [2, 32], strides = [1, 1]} : vector<2x128xf32> to vector<2x32xf32>
    %56 = vector.extract_strided_slice %53 {offsets = [0, 64], sizes = [2, 32], strides = [1, 1]} : vector<2x128xf32> to vector<2x32xf32>
    %57 = vector.extract_strided_slice %52 {offsets = [0, 96], sizes = [2, 32], strides = [1, 1]} : vector<2x128xf32> to vector<2x32xf32>
    %58 = arith.mulf %55, %42 : vector<2x32xf32>
    %59 = arith.mulf %54, %56 : vector<2x32xf32>
    %60 = arith.addf %58, %59 : vector<2x32xf32>
    %61 = math.tanh %60 : vector<2x32xf32>
    %62 = arith.mulf %57, %61 : vector<2x32xf32>
    %63 = vector.extract_strided_slice %6 {offsets = [6, 0], sizes = [2, 128], strides = [1, 1]} : vector<16x128xf32> to vector<2x128xf32>
    %cst_15 = arith.constant dense<0.000000e+00> : vector<2x128xf32>
    %64 = tpu.matmul %62, %1, %cst_15 {dimension_numbers = #tpu.dot_dimension_numbers<[1], [0], [0], [1], [0, 0, 1, 1], [], []>} : vector<2x32xf32>, vector<32x128xf32>, vector<2x128xf32> -> vector<2x128xf32>
    %65 = arith.addf %63, %64 : vector<2x128xf32>
    %66 = arith.negf %65 : vector<2x128xf32>
    %67 = math.exp %66 : vector<2x128xf32>
    %cst_16 = arith.constant 1.000000e+00 : f32
    %68 = vector.broadcast %cst_16 : f32 to vector<2x128xf32>
    %69 = arith.addf %68, %67 : vector<2x128xf32>
    %70 = arith.divf %68, %69 : vector<2x128xf32>
    %71 = math.tanh %65 : vector<2x128xf32>
    %72 = vector.extract_strided_slice %70 {offsets = [0, 0], sizes = [2, 32], strides = [1, 1]} : vector<2x128xf32> to vector<2x32xf32>
    %73 = vector.extract_strided_slice %70 {offsets = [0, 32], sizes = [2, 32], strides = [1, 1]} : vector<2x128xf32> to vector<2x32xf32>
    %74 = vector.extract_strided_slice %71 {offsets = [0, 64], sizes = [2, 32], strides = [1, 1]} : vector<2x128xf32> to vector<2x32xf32>
    %75 = vector.extract_strided_slice %70 {offsets = [0, 96], sizes = [2, 32], strides = [1, 1]} : vector<2x128xf32> to vector<2x32xf32>
    %76 = arith.mulf %73, %60 : vector<2x32xf32>
    %77 = arith.mulf %72, %74 : vector<2x32xf32>
    %78 = arith.addf %76, %77 : vector<2x32xf32>
    %79 = math.tanh %78 : vector<2x32xf32>
    %80 = arith.mulf %75, %79 : vector<2x32xf32>
    %81 = vector.extract_strided_slice %6 {offsets = [8, 0], sizes = [2, 128], strides = [1, 1]} : vector<16x128xf32> to vector<2x128xf32>
    %cst_17 = arith.constant dense<0.000000e+00> : vector<2x128xf32>
    %82 = tpu.matmul %80, %1, %cst_17 {dimension_numbers = #tpu.dot_dimension_numbers<[1], [0], [0], [1], [0, 0, 1, 1], [], []>} : vector<2x32xf32>, vector<32x128xf32>, vector<2x128xf32> -> vector<2x128xf32>
    %83 = arith.addf %81, %82 : vector<2x128xf32>
    %84 = arith.negf %83 : vector<2x128xf32>
    %85 = math.exp %84 : vector<2x128xf32>
    %cst_18 = arith.constant 1.000000e+00 : f32
    %86 = vector.broadcast %cst_18 : f32 to vector<2x128xf32>
    %87 = arith.addf %86, %85 : vector<2x128xf32>
    %88 = arith.divf %86, %87 : vector<2x128xf32>
    %89 = math.tanh %83 : vector<2x128xf32>
    %90 = vector.extract_strided_slice %88 {offsets = [0, 0], sizes = [2, 32], strides = [1, 1]} : vector<2x128xf32> to vector<2x32xf32>
    %91 = vector.extract_strided_slice %88 {offsets = [0, 32], sizes = [2, 32], strides = [1, 1]} : vector<2x128xf32> to vector<2x32xf32>
    %92 = vector.extract_strided_slice %89 {offsets = [0, 64], sizes = [2, 32], strides = [1, 1]} : vector<2x128xf32> to vector<2x32xf32>
    %93 = vector.extract_strided_slice %88 {offsets = [0, 96], sizes = [2, 32], strides = [1, 1]} : vector<2x128xf32> to vector<2x32xf32>
    %94 = arith.mulf %91, %78 : vector<2x32xf32>
    %95 = arith.mulf %90, %92 : vector<2x32xf32>
    %96 = arith.addf %94, %95 : vector<2x32xf32>
    %97 = math.tanh %96 : vector<2x32xf32>
    %98 = arith.mulf %93, %97 : vector<2x32xf32>
    %99 = vector.extract_strided_slice %6 {offsets = [10, 0], sizes = [2, 128], strides = [1, 1]} : vector<16x128xf32> to vector<2x128xf32>
    %cst_19 = arith.constant dense<0.000000e+00> : vector<2x128xf32>
    %100 = tpu.matmul %98, %1, %cst_19 {dimension_numbers = #tpu.dot_dimension_numbers<[1], [0], [0], [1], [0, 0, 1, 1], [], []>} : vector<2x32xf32>, vector<32x128xf32>, vector<2x128xf32> -> vector<2x128xf32>
    %101 = arith.addf %99, %100 : vector<2x128xf32>
    %102 = arith.negf %101 : vector<2x128xf32>
    %103 = math.exp %102 : vector<2x128xf32>
    %cst_20 = arith.constant 1.000000e+00 : f32
    %104 = vector.broadcast %cst_20 : f32 to vector<2x128xf32>
    %105 = arith.addf %104, %103 : vector<2x128xf32>
    %106 = arith.divf %104, %105 : vector<2x128xf32>
    %107 = math.tanh %101 : vector<2x128xf32>
    %108 = vector.extract_strided_slice %106 {offsets = [0, 0], sizes = [2, 32], strides = [1, 1]} : vector<2x128xf32> to vector<2x32xf32>
    %109 = vector.extract_strided_slice %106 {offsets = [0, 32], sizes = [2, 32], strides = [1, 1]} : vector<2x128xf32> to vector<2x32xf32>
    %110 = vector.extract_strided_slice %107 {offsets = [0, 64], sizes = [2, 32], strides = [1, 1]} : vector<2x128xf32> to vector<2x32xf32>
    %111 = vector.extract_strided_slice %106 {offsets = [0, 96], sizes = [2, 32], strides = [1, 1]} : vector<2x128xf32> to vector<2x32xf32>
    %112 = arith.mulf %109, %96 : vector<2x32xf32>
    %113 = arith.mulf %108, %110 : vector<2x32xf32>
    %114 = arith.addf %112, %113 : vector<2x32xf32>
    %115 = math.tanh %114 : vector<2x32xf32>
    %116 = arith.mulf %111, %115 : vector<2x32xf32>
    %117 = vector.extract_strided_slice %6 {offsets = [12, 0], sizes = [2, 128], strides = [1, 1]} : vector<16x128xf32> to vector<2x128xf32>
    %cst_21 = arith.constant dense<0.000000e+00> : vector<2x128xf32>
    %118 = tpu.matmul %116, %1, %cst_21 {dimension_numbers = #tpu.dot_dimension_numbers<[1], [0], [0], [1], [0, 0, 1, 1], [], []>} : vector<2x32xf32>, vector<32x128xf32>, vector<2x128xf32> -> vector<2x128xf32>
    %119 = arith.addf %117, %118 : vector<2x128xf32>
    %120 = arith.negf %119 : vector<2x128xf32>
    %121 = math.exp %120 : vector<2x128xf32>
    %cst_22 = arith.constant 1.000000e+00 : f32
    %122 = vector.broadcast %cst_22 : f32 to vector<2x128xf32>
    %123 = arith.addf %122, %121 : vector<2x128xf32>
    %124 = arith.divf %122, %123 : vector<2x128xf32>
    %125 = math.tanh %119 : vector<2x128xf32>
    %126 = vector.extract_strided_slice %124 {offsets = [0, 0], sizes = [2, 32], strides = [1, 1]} : vector<2x128xf32> to vector<2x32xf32>
    %127 = vector.extract_strided_slice %124 {offsets = [0, 32], sizes = [2, 32], strides = [1, 1]} : vector<2x128xf32> to vector<2x32xf32>
    %128 = vector.extract_strided_slice %125 {offsets = [0, 64], sizes = [2, 32], strides = [1, 1]} : vector<2x128xf32> to vector<2x32xf32>
    %129 = vector.extract_strided_slice %124 {offsets = [0, 96], sizes = [2, 32], strides = [1, 1]} : vector<2x128xf32> to vector<2x32xf32>
    %130 = arith.mulf %127, %114 : vector<2x32xf32>
    %131 = arith.mulf %126, %128 : vector<2x32xf32>
    %132 = arith.addf %130, %131 : vector<2x32xf32>
    %133 = math.tanh %132 : vector<2x32xf32>
    %134 = arith.mulf %129, %133 : vector<2x32xf32>
    %135 = vector.extract_strided_slice %6 {offsets = [14, 0], sizes = [2, 128], strides = [1, 1]} : vector<16x128xf32> to vector<2x128xf32>
    %cst_23 = arith.constant dense<0.000000e+00> : vector<2x128xf32>
    %136 = tpu.matmul %134, %1, %cst_23 {dimension_numbers = #tpu.dot_dimension_numbers<[1], [0], [0], [1], [0, 0, 1, 1], [], []>} : vector<2x32xf32>, vector<32x128xf32>, vector<2x128xf32> -> vector<2x128xf32>
    %137 = arith.addf %135, %136 : vector<2x128xf32>
    %138 = arith.negf %137 : vector<2x128xf32>
    %139 = math.exp %138 : vector<2x128xf32>
    %cst_24 = arith.constant 1.000000e+00 : f32
    %140 = vector.broadcast %cst_24 : f32 to vector<2x128xf32>
    %141 = arith.addf %140, %139 : vector<2x128xf32>
    %142 = arith.divf %140, %141 : vector<2x128xf32>
    %143 = math.tanh %137 : vector<2x128xf32>
    %144 = vector.extract_strided_slice %142 {offsets = [0, 0], sizes = [2, 32], strides = [1, 1]} : vector<2x128xf32> to vector<2x32xf32>
    %145 = vector.extract_strided_slice %142 {offsets = [0, 32], sizes = [2, 32], strides = [1, 1]} : vector<2x128xf32> to vector<2x32xf32>
    %146 = vector.extract_strided_slice %143 {offsets = [0, 64], sizes = [2, 32], strides = [1, 1]} : vector<2x128xf32> to vector<2x32xf32>
    %147 = vector.extract_strided_slice %142 {offsets = [0, 96], sizes = [2, 32], strides = [1, 1]} : vector<2x128xf32> to vector<2x32xf32>
    %148 = arith.mulf %145, %132 : vector<2x32xf32>
    %149 = arith.mulf %144, %146 : vector<2x32xf32>
    %150 = arith.addf %148, %149 : vector<2x32xf32>
    %151 = math.tanh %150 : vector<2x32xf32>
    %152 = arith.mulf %147, %151 : vector<2x32xf32>
    %153 = vector.extract_strided_slice %0 {offsets = [14, 0], sizes = [2, 32], strides = [1, 1]} : vector<16x32xf32> to vector<2x32xf32>
    %c0_25 = arith.constant 0 : index
    %c0_26 = arith.constant 0 : index
    %154 = vector.load %arg4[%c0_25, %c0_26] : memref<32x128xf32, #tpu.memory_space<vmem>>, vector<32x128xf32>
    %cst_27 = arith.constant dense<0.000000e+00> : vector<2x128xf32>
    %155 = tpu.matmul %153, %154, %cst_27 {dimension_numbers = #tpu.dot_dimension_numbers<[1], [0], [0], [1], [0, 0, 1, 1], [], []>} : vector<2x32xf32>, vector<32x128xf32>, vector<2x128xf32> -> vector<2x128xf32>
    %c0_28 = arith.constant 0 : index
    %c0_29 = arith.constant 0 : index
    %156 = vector.load %arg5[%c0_28, %c0_29] : memref<1x128xf32, #tpu.memory_space<vmem>>, vector<1x128xf32>
    %157 = vector.broadcast %156 : vector<1x128xf32> to vector<2x128xf32>
    %158 = arith.addf %155, %157 : vector<2x128xf32>
    %159 = arith.negf %158 : vector<2x128xf32>
    %160 = math.exp %159 : vector<2x128xf32>
    %cst_30 = arith.constant 1.000000e+00 : f32
    %161 = vector.broadcast %cst_30 : f32 to vector<2x128xf32>
    %162 = arith.addf %161, %160 : vector<2x128xf32>
    %163 = arith.divf %161, %162 : vector<2x128xf32>
    %164 = math.tanh %158 : vector<2x128xf32>
    %165 = vector.extract_strided_slice %163 {offsets = [0, 0], sizes = [2, 32], strides = [1, 1]} : vector<2x128xf32> to vector<2x32xf32>
    %166 = vector.extract_strided_slice %164 {offsets = [0, 64], sizes = [2, 32], strides = [1, 1]} : vector<2x128xf32> to vector<2x32xf32>
    %167 = arith.mulf %165, %166 : vector<2x32xf32>
    %168 = vector.extract_strided_slice %163 {offsets = [0, 96], sizes = [2, 32], strides = [1, 1]} : vector<2x128xf32> to vector<2x32xf32>
    %169 = math.tanh %167 : vector<2x32xf32>
    %170 = arith.mulf %168, %169 : vector<2x32xf32>
    %171 = tpu.concatenate %152, %170 in 1 : vector<2x32xf32>, vector<2x32xf32> -> vector<2x64xf32>
    %c0_31 = arith.constant 0 : index
    %c0_32 = arith.constant 0 : index
    %172 = vector.load %arg6[%c0_31, %c0_32] : memref<2x64xf32, #tpu.memory_space<vmem>>, vector<2x64xf32>
    tpu.vector_store %arg6[%c0_31, %c0_32], %171 {strides = array<i32>} : memref<2x64xf32, #tpu.memory_space<vmem>>, vector<2x64xf32>,
    return
  }
}

</mosaic_0001>

<llo_original>
// kernel: _forward_impl.1
$region0: #{_forward_impl.1}
  #allocation0 [shape = 'u32[]', space=smem, size = 0x4, offset = 0x4, fixed_abs, tag = 'smem constant byte address 0x4 - core index']
  #allocation1 [shape = 'u32[144,128]{1,0:T(1,128)}', space=vmem, size = 0x12000, scoped, tag = 'internal scratch']
  %s0 = inlined_call_operand.vmem [shape: f32[16,32], index: 0, kind: input, shape index: {}]
  %s1 = inlined_call_operand.vmem [shape: f32[32,128], index: 1, kind: input, shape index: {}]
  %s2 = inlined_call_operand.vmem [shape: f32[32,128], index: 2, kind: input, shape index: {}]
  %s3 = inlined_call_operand.vmem [shape: f32[1,128], index: 3, kind: input, shape index: {}]
  %s4 = inlined_call_operand.vmem [shape: f32[32,128], index: 4, kind: input, shape index: {}]
  %s5 = inlined_call_operand.vmem [shape: f32[1,128], index: 5, kind: input, shape index: {}]
  %s6 = inlined_call_operand.hbm [shape: f32[2,64], index: 6, kind: output, shape index: {}]
  %s7 = sld [smem:[#allocation0]]
  $region34: #{_forward_impl.1} parent=0
    _
  %s9 = ssub.s32 1, %s7
  %s10 = scalar_select 0, %s9, %s7
  $region1: #{_forward_impl.1} parent=0
    #allocation2 [shape = 'u8[1024]{0}', space=vmem, size = 0x400, scoped, tag = 'output window, operand 0, single buffered']
    #allocation3 [shape = 's32[1]{0}', space=sflag, size = 0x4, scoped, tag = 'scoped memory for _forward_impl.1']
    %11 = vsyncpa [#allocation3], 0
    // Predicated region
    $region2: #{_forward_impl.1} parent=1 // pred_check
      _
    $region3: #{_forward_impl.1} parent=1 // pred_check_branch
      %13 = sbr.rel (0) target = $region5
    $region4: #{_forward_impl.1} parent=1 // pred_region
      _
    $region5: #{_forward_impl.1} parent=1 // pred_fallthru
      _
    // Predicated region
    $region6: #{_forward_impl.1} parent=1 // pred_check
      _
    $region7: #{_forward_impl.1} parent=1 // pred_check_branch
      %15 = sbr.rel (0) target = $region9
    $region8: #{_forward_impl.1} parent=1 // pred_region
      _
    $region9: #{_forward_impl.1} parent=1 // pred_fallthru
      _
    // Predicated region
    $region10: #{_forward_impl.1} parent=1 // pred_check
      _
    $region11: #{_forward_impl.1} parent=1 // pred_check_branch
      %17 = sbr.rel (0) target = $region13
    $region12: #{_forward_impl.1} parent=1 // pred_region
      _
    $region13: #{_forward_impl.1} parent=1 // pred_fallthru
      _
    // Predicated region
    $region14: #{_forward_impl.1} parent=1 // pred_check
      _
    $region15: #{_forward_impl.1} parent=1 // pred_check_branch
      %19 = sbr.rel (0) target = $region17
    $region16: #{_forward_impl.1} parent=1 // pred_region
      _
    $region17: #{_forward_impl.1} parent=1 // pred_fallthru
      _
    // Predicated region
    $region18: #{_forward_impl.1} parent=1 // pred_check
      _
    $region19: #{_forward_impl.1} parent=1 // pred_check_branch
      %21 = sbr.rel (0) target = $region21
    $region20: #{_forward_impl.1} parent=1 // pred_region
      _
    $region21: #{_forward_impl.1} parent=1 // pred_fallthru
      _
    // Predicated region
    $region22: #{_forward_impl.1} parent=1 // pred_check
      _
    $region23: #{_forward_impl.1} parent=1 // pred_check_branch
      %23 = sbr.rel (0) target = $region25
    $region24: #{_forward_impl.1} parent=1 // pred_region
      _
    $region25: #{_forward_impl.1} parent=1 // pred_fallthru
      _
    %v24 = vld [vmem:[%s0] sm:$0xff]
    %v25 = vld [vmem:[%s0 + $0x8] sm:$0xff]
    %v26 = vld [vmem:[%s2] sm:$0xff]
    %v27 = vld [vmem:[%s2 + $0x8] sm:$0xff]
    %v28 = vld [vmem:[%s2 + $0x10] sm:$0xff]
    %v29 = vld [vmem:[%s2 + $0x18] sm:$0xff]
    %v30 = vld [vmem:[%s1] sm:$0xff]
    %v31 = vld [vmem:[%s1 + $0x8] sm:$0xff]
    %v32 = vld [vmem:[%s1 + $0x10] sm:$0xff]
    %v33 = vld [vmem:[%s1 + $0x18] sm:$0xff]
    %v34 = vld [vmem:[%s3] sm:$0x1]
    %v36 = vlaneseq
    %v37 = vshrl.u32 %v36, 7
    %v38 = vsub.s32 0, %v37
    %v39 = vrot.slane %v34, %v38
    %vm41 = vcmask 261120
    %v43 = vsel %vm41, %v24, 0
    %v46 = vsel %vm41, %v25, 0
    %48 = vmatprep.subr.mxu0 0.0
    %49 = vmatpush1.msra.mxu0 0.0
    %50 = vmatprep.subr.mxu0 0.0
    %51 = vmatpush1.msra.mxu0 0.0
    %52 = vmatprep.subr.mxu0 0.0
    %53 = vmatpush1.msra.mxu0 0.0
    %54 = vmatprep.subr.mxu0 0.0
    %55 = vmatpush1.msra.mxu0 0.0
    %56 = vmatprep.subr.mxu0 0.0
    %57 = vmatpush1.msra.mxu0 0.0
    %58 = vmatprep.subr.mxu0 0.0
    %59 = vmatpush1.msra.mxu0 0.0
    %60 = vmatprep.subr.mxu0 0.0
    %61 = vmatpush1.msra.mxu0 0.0
    %62 = vmatprep.subr.mxu0 0.0
    %63 = vmatpush1.msra.mxu0 0.0
    %64 = vmatprep.subr.mxu0 0.0
    %65 = vmatpush1.msra.mxu0 0.0
    %66 = vmatprep.subr.mxu0 0.0
    %67 = vmatpush1.msra.mxu0 0.0
    %68 = vmatprep.subr.mxu0 0.0
    %69 = vmatpush1.msra.mxu0 0.0
    %70 = vmatprep.subr.mxu0 0.0
    %71 = vmatpush1.msra.mxu0 0.0
    %72 = vmatprep.subr.mxu0 0.0
    %73 = vmatpush1.msra.mxu0 %v33
    %74 = vmatprep.subr.mxu0 0.0
    %75 = vmatpush1.msra.mxu0 %v32
    %76 = vmatprep.subr.mxu0 0.0
    %77 = vmatpush1.msra.mxu0 %v31
    %78 = vmatprep.subr.mxu0 0.0
    %79 = vmatpush1.msra.mxu0 %v30
    %80 = vmatprep.subr.mxu0 0.0
    %81 = vmatpush2.msra.mxu0 0.0
    %82 = vmatprep.subr.mxu0 0.0
    %83 = vmatpush2.msra.mxu0 0.0
    %84 = vmatprep.subr.mxu0 0.0
    %85 = vmatpush2.msra.mxu0 0.0
    %86 = vmatprep.subr.mxu0 0.0
    %87 = vmatpush2.msra.mxu0 0.0
    %88 = vmatprep.subr.mxu0 0.0
    %89 = vmatpush2.msra.mxu0 0.0
    %90 = vmatprep.subr.mxu0 0.0
    %91 = vmatpush2.msra.mxu0 0.0
    %92 = vmatprep.subr.mxu0 0.0
    %93 = vmatpush2.msra.mxu0 0.0
    %94 = vmatprep.subr.mxu0 0.0
    %95 = vmatpush2.msra.mxu0 0.0
    %96 = vmatprep.subr.mxu0 0.0
    %97 = vmatpush2.msra.mxu0 0.0
    %98 = vmatprep.subr.mxu0 0.0
    %99 = vmatpush2.msra.mxu0 0.0
    %100 = vmatprep.subr.mxu0 0.0
    %101 = vmatpush2.msra.mxu0 0.0
    %102 = vmatprep.subr.mxu0 0.0
    %103 = vmatpush2.msra.mxu0 0.0
    %104 = vmatprep.subr.mxu0 0.0
    %105 = vmatpush2.msra.mxu0 0.0
    %106 = vmatprep.subr.mxu0 0.0
    %107 = vmatpush2.msra.mxu0 0.0
    %108 = vmatprep.subr.mxu0 0.0
    %109 = vmatpush2.msra.mxu0 0.0
    %110 = vmatprep.subr.mxu0 0.0
    %111 = vmatpush2.msra.mxu0 0.0
    %112 = vmatprep.mubr.f32.mxu0 0.0
    %113 = vmatmul.mubr.f32.gmra.mxu0 %v43
    %v114 = vpop.f32.mrf.mxu0
    %v115 = vadd.f32 %v39, %v114
    %v116 = vpop.f32.mrf.mxu0
    %117 = vmatprep.mubr.f32.mxu0 0.0
    %118 = vmatmul.mubr.f32.gmra.mxu0 %v46
    %v119 = vpop.f32.mrf.mxu0
    %v120 = vadd.f32 %v39, %v119
    %v121 = vpop.f32.mrf.mxu0
    %122 = vdwg.mxu0
    %v124 = vsel %vm41, 0.0, 0
    %126 = vmatprep.subr.mxu0 0.0
    %127 = vmatpush1.msra.mxu0 0.0
    %128 = vmatprep.subr.mxu0 0.0
    %129 = vmatpush1.msra.mxu0 0.0
    %130 = vmatprep.subr.mxu0 0.0
    %131 = vmatpush1.msra.mxu0 0.0
    %132 = vmatprep.subr.mxu0 0.0
    %133 = vmatpush1.msra.mxu0 0.0
    %134 = vmatprep.subr.mxu0 0.0
    %135 = vmatpush1.msra.mxu0 0.0
    %136 = vmatprep.subr.mxu0 0.0
    %137 = vmatpush1.msra.mxu0 0.0
    %138 = vmatprep.subr.mxu0 0.0
    %139 = vmatpush1.msra.mxu0 0.0
    %140 = vmatprep.subr.mxu0 0.0
    %141 = vmatpush1.msra.mxu0 0.0
    %142 = vmatprep.subr.mxu0 0.0
    %143 = vmatpush1.msra.mxu0 0.0
    %144 = vmatprep.subr.mxu0 0.0
    %145 = vmatpush1.msra.mxu0 0.0
    %146 = vmatprep.subr.mxu0 0.0
    %147 = vmatpush1.msra.mxu0 0.0
    %148 = vmatprep.subr.mxu0 0.0
    %149 = vmatpush1.msra.mxu0 0.0
    %150 = vmatprep.subr.mxu0 0.0
    %151 = vmatpush1.msra.mxu0 %v29
    %152 = vmatprep.subr.mxu0 0.0
    %153 = vmatpush1.msra.mxu0 %v28
    %154 = vmatprep.subr.mxu0 0.0
    %155 = vmatpush1.msra.mxu0 %v27
    %156 = vmatprep.subr.mxu0 0.0
    %157 = vmatpush1.msra.mxu0 %v26
    %158 = vmatprep.subr.mxu0 0.0
    %159 = vmatpush2.msra.mxu0 0.0
    %160 = vmatprep.subr.mxu0 0.0
    %161 = vmatpush2.msra.mxu0 0.0
    %162 = vmatprep.subr.mxu0 0.0
    %163 = vmatpush2.msra.mxu0 0.0
    %164 = vmatprep.subr.mxu0 0.0
    %165 = vmatpush2.msra.mxu0 0.0
    %166 = vmatprep.subr.mxu0 0.0
    %167 = vmatpush2.msra.mxu0 0.0
    %168 = vmatprep.subr.mxu0 0.0
    %169 = vmatpush2.msra.mxu0 0.0
    %170 = vmatprep.subr.mxu0 0.0
    %171 = vmatpush2.msra.mxu0 0.0
    %172 = vmatprep.subr.mxu0 0.0
    %173 = vmatpush2.msra.mxu0 0.0
    %174 = vmatprep.subr.mxu0 0.0
    %175 = vmatpush2.msra.mxu0 0.0
    %176 = vmatprep.subr.mxu0 0.0
    %177 = vmatpush2.msra.mxu0 0.0
    %178 = vmatprep.subr.mxu0 0.0
    %179 = vmatpush2.msra.mxu0 0.0
    %180 = vmatprep.subr.mxu0 0.0
    %181 = vmatpush2.msra.mxu0 0.0
    %182 = vmatprep.subr.mxu0 0.0
    %183 = vmatpush2.msra.mxu0 0.0
    %184 = vmatprep.subr.mxu0 0.0
    %185 = vmatpush2.msra.mxu0 0.0
    %186 = vmatprep.subr.mxu0 0.0
    %187 = vmatpush2.msra.mxu0 0.0
    %188 = vmatprep.subr.mxu0 0.0
    %189 = vmatpush2.msra.mxu0 0.0
    %190 = vmatprep.mubr.f32.mxu0 0.0
    %191 = vmatmul.mubr.f32.gmra.mxu0 %v124
    %v192 = vpop.f32.mrf.mxu0
    %v193 = vadd.f32 0.0, %v192
    %v194 = vpop.f32.mrf.mxu0
    %195 = vdwg.mxu0
    %v196 = vadd.f32 %v115, %v193
    %v197 = vxor.u32 %v196, 2147483648
    %v198 = vmul.f32 %v197, 1.442695
    %v199 = vpow.pop %v198
    %v200 = vadd.f32 %v199, 1.0
    %v201 = vrcp.pop %v200
    %v202 = vmul.f32 1.0, %v201
    %v203 = vtanh.pop %v196
    %v204 = vmul.f32 %v202, 0.0
    %206 = vrot.lane.b32.xlu0 %v203, 64
    %v207 = vpop.permute.xlu0 %206
    %v209 = vmul.f32 %v202, %v207
    %211 = vrot.lane.b32.xlu0 %v209, 32
    %v212 = vpop.permute.xlu0 %211
    %v214 = vadd.f32 %v204, %v212
    %v215 = vtanh.pop %v214
    %217 = vrot.lane.b32.xlu0 %v215, 64
    %v218 = vpop.permute.xlu0 %217
    %v220 = vmul.f32 %v202, %v218
    %222 = vrot.lane.b32.xlu0 %v220, 32
    %v223 = vpop.permute.xlu0 %222
    %v224 = vsel %vm41, %v223, 0
    %226 = vmatprep.subr.mxu0 0.0
    %227 = vmatpush1.msra.mxu0 0.0
    %228 = vmatprep.subr.mxu0 0.0
    %229 = vmatpush1.msra.mxu0 0.0
    %230 = vmatprep.subr.mxu0 0.0
    %231 = vmatpush1.msra.mxu0 0.0
    %232 = vmatprep.subr.mxu0 0.0
    %233 = vmatpush1.msra.mxu0 0.0
    %234 = vmatprep.subr.mxu0 0.0
    %235 = vmatpush1.msra.mxu0 0.0
    %236 = vmatprep.subr.mxu0 0.0
    %237 = vmatpush1.msra.mxu0 0.0
    %238 = vmatprep.subr.mxu0 0.0
    %239 = vmatpush1.msra.mxu0 0.0
    %240 = vmatprep.subr.mxu0 0.0
    %241 = vmatpush1.msra.mxu0 0.0
    %242 = vmatprep.subr.mxu0 0.0
    %243 = vmatpush1.msra.mxu0 0.0
    %244 = vmatprep.subr.mxu0 0.0
    %245 = vmatpush1.msra.mxu0 0.0
    %246 = vmatprep.subr.mxu0 0.0
    %247 = vmatpush1.msra.mxu0 0.0
    %248 = vmatprep.subr.mxu0 0.0
    %249 = vmatpush1.msra.mxu0 0.0
    %250 = vmatprep.subr.mxu0 0.0
    %251 = vmatpush1.msra.mxu0 %v29
    %252 = vmatprep.subr.mxu0 0.0
    %253 = vmatpush1.msra.mxu0 %v28
    %254 = vmatprep.subr.mxu0 0.0
    %255 = vmatpush1.msra.mxu0 %v27
    %256 = vmatprep.subr.mxu0 0.0
    %257 = vmatpush1.msra.mxu0 %v26
    %258 = vmatprep.subr.mxu0 0.0
    %259 = vmatpush2.msra.mxu0 0.0
    %260 = vmatprep.subr.mxu0 0.0
    %261 = vmatpush2.msra.mxu0 0.0
    %262 = vmatprep.subr.mxu0 0.0
    %263 = vmatpush2.msra.mxu0 0.0
    %264 = vmatprep.subr.mxu0 0.0
    %265 = vmatpush2.msra.mxu0 0.0
    %266 = vmatprep.subr.mxu0 0.0
    %267 = vmatpush2.msra.mxu0 0.0
    %268 = vmatprep.subr.mxu0 0.0
    %269 = vmatpush2.msra.mxu0 0.0
    %270 = vmatprep.subr.mxu0 0.0
    %271 = vmatpush2.msra.mxu0 0.0
    %272 = vmatprep.subr.mxu0 0.0
    %273 = vmatpush2.msra.mxu0 0.0
    %274 = vmatprep.subr.mxu0 0.0
    %275 = vmatpush2.msra.mxu0 0.0
    %276 = vmatprep.subr.mxu0 0.0
    %277 = vmatpush2.msra.mxu0 0.0
    %278 = vmatprep.subr.mxu0 0.0
    %279 = vmatpush2.msra.mxu0 0.0
    %280 = vmatprep.subr.mxu0 0.0
    %281 = vmatpush2.msra.mxu0 0.0
    %282 = vmatprep.subr.mxu0 0.0
    %283 = vmatpush2.msra.mxu0 0.0
    %284 = vmatprep.subr.mxu0 0.0
    %285 = vmatpush2.msra.mxu0 0.0
    %286 = vmatprep.subr.mxu0 0.0
    %287 = vmatpush2.msra.mxu0 0.0
    %288 = vmatprep.subr.mxu0 0.0
    %289 = vmatpush2.msra.mxu0 0.0
    %290 = vmatprep.mubr.f32.mxu0 0.0
    %291 = vmatmul.mubr.f32.gmra.mxu0 %v224
    %v292 = vpop.f32.mrf.mxu0
    %v293 = vadd.f32 0.0, %v292
    %v294 = vpop.f32.mrf.mxu0
    %295 = vdwg.mxu0
    %v297 = vrot.slane %v293, 6
    %v299 = vadd.f32 %v115, %v297
    %v300 = vxor.u32 %v299, 2147483648
    %v301 = vmul.f32 %v300, 1.442695
    %v302 = vpow.pop %v301
    %v303 = vadd.f32 %v302, 1.0
    %v304 = vrcp.pop %v303
    %v305 = vmul.f32 1.0, %v304
    %v306 = vtanh.pop %v299
    %v308 = vrot.slane %v214, 6
    %v310 = vmul.f32 %v305, %v308
    %312 = vrot.lane.b32.xlu0 %v306, 64
    %v313 = vpop.permute.xlu0 %312
    %v315 = vmul.f32 %v305, %v313
    %317 = vrot.lane.b32.xlu0 %v315, 32
    %v318 = vpop.permute.xlu0 %317
    %v320 = vadd.f32 %v310, %v318
    %v321 = vtanh.pop %v320
    %323 = vrot.lane.b32.xlu0 %v321, 64
    %v324 = vpop.permute.xlu0 %323
    %v326 = vmul.f32 %v305, %v324
    %v328 = vrot.slane %v326, 2
    %329 = vrot.lane.b32.xlu0 %v328, 32
    %v330 = vpop.permute.xlu0 %329
    %v331 = vsel %vm41, %v330, 0
    %333 = vmatprep.subr.mxu0 0.0
    %334 = vmatpush1.msra.mxu0 0.0
    %335 = vmatprep.subr.mxu0 0.0
    %336 = vmatpush1.msra.mxu0 0.0
    %337 = vmatprep.subr.mxu0 0.0
    %338 = vmatpush1.msra.mxu0 0.0
    %339 = vmatprep.subr.mxu0 0.0
    %340 = vmatpush1.msra.mxu0 0.0
    %341 = vmatprep.subr.mxu0 0.0
    %342 = vmatpush1.msra.mxu0 0.0
    %343 = vmatprep.subr.mxu0 0.0
    %344 = vmatpush1.msra.mxu0 0.0
    %345 = vmatprep.subr.mxu0 0.0
    %346 = vmatpush1.msra.mxu0 0.0
    %347 = vmatprep.subr.mxu0 0.0
    %348 = vmatpush1.msra.mxu0 0.0
    %349 = vmatprep.subr.mxu0 0.0
    %350 = vmatpush1.msra.mxu0 0.0
    %351 = vmatprep.subr.mxu0 0.0
    %352 = vmatpush1.msra.mxu0 0.0
    %353 = vmatprep.subr.mxu0 0.0
    %354 = vmatpush1.msra.mxu0 0.0
    %355 = vmatprep.subr.mxu0 0.0
    %356 = vmatpush1.msra.mxu0 0.0
    %357 = vmatprep.subr.mxu0 0.0
    %358 = vmatpush1.msra.mxu0 %v29
    %359 = vmatprep.subr.mxu0 0.0
    %360 = vmatpush1.msra.mxu0 %v28
    %361 = vmatprep.subr.mxu0 0.0
    %362 = vmatpush1.msra.mxu0 %v27
    %363 = vmatprep.subr.mxu0 0.0
    %364 = vmatpush1.msra.mxu0 %v26
    %365 = vmatprep.subr.mxu0 0.0
    %366 = vmatpush2.msra.mxu0 0.0
    %367 = vmatprep.subr.mxu0 0.0
    %368 = vmatpush2.msra.mxu0 0.0
    %369 = vmatprep.subr.mxu0 0.0
    %370 = vmatpush2.msra.mxu0 0.0
    %371 = vmatprep.subr.mxu0 0.0
    %372 = vmatpush2.msra.mxu0 0.0
    %373 = vmatprep.subr.mxu0 0.0
    %374 = vmatpush2.msra.mxu0 0.0
    %375 = vmatprep.subr.mxu0 0.0
    %376 = vmatpush2.msra.mxu0 0.0
    %377 = vmatprep.subr.mxu0 0.0
    %378 = vmatpush2.msra.mxu0 0.0
    %379 = vmatprep.subr.mxu0 0.0
    %380 = vmatpush2.msra.mxu0 0.0
    %381 = vmatprep.subr.mxu0 0.0
    %382 = vmatpush2.msra.mxu0 0.0
    %383 = vmatprep.subr.mxu0 0.0
    %384 = vmatpush2.msra.mxu0 0.0
    %385 = vmatprep.subr.mxu0 0.0
    %386 = vmatpush2.msra.mxu0 0.0
    %387 = vmatprep.subr.mxu0 0.0
    %388 = vmatpush2.msra.mxu0 0.0
    %389 = vmatprep.subr.mxu0 0.0
    %390 = vmatpush2.msra.mxu0 0.0
    %391 = vmatprep.subr.mxu0 0.0
    %392 = vmatpush2.msra.mxu0 0.0
    %393 = vmatprep.subr.mxu0 0.0
    %394 = vmatpush2.msra.mxu0 0.0
    %395 = vmatprep.subr.mxu0 0.0
    %396 = vmatpush2.msra.mxu0 0.0
    %397 = vmatprep.mubr.f32.mxu0 0.0
    %398 = vmatmul.mubr.f32.gmra.mxu0 %v331
    %v399 = vpop.f32.mrf.mxu0
    %v400 = vadd.f32 0.0, %v399
    %v401 = vpop.f32.mrf.mxu0
    %402 = vdwg.mxu0
    %v404 = vrot.slane %v400, 4
    %v406 = vadd.f32 %v115, %v404
    %v407 = vxor.u32 %v406, 2147483648
    %v408 = vmul.f32 %v407, 1.442695
    %v409 = vpow.pop %v408
    %v410 = vadd.f32 %v409, 1.0
    %v411 = vrcp.pop %v410
    %v412 = vmul.f32 1.0, %v411
    %v413 = vtanh.pop %v406
    %v415 = vrot.slane %v320, 6
    %v417 = vmul.f32 %v412, %v415
    %419 = vrot.lane.b32.xlu0 %v413, 64
    %v420 = vpop.permute.xlu0 %419
    %v422 = vmul.f32 %v412, %v420
    %424 = vrot.lane.b32.xlu0 %v422, 32
    %v425 = vpop.permute.xlu0 %424
    %v427 = vadd.f32 %v417, %v425
    %v428 = vtanh.pop %v427
    %430 = vrot.lane.b32.xlu0 %v428, 64
    %v431 = vpop.permute.xlu0 %430
    %v433 = vmul.f32 %v412, %v431
    %v435 = vrot.slane %v433, 4
    %436 = vrot.lane.b32.xlu0 %v435, 32
    %v437 = vpop.permute.xlu0 %436
    %v438 = vsel %vm41, %v437, 0
    %440 = vmatprep.subr.mxu0 0.0
    %441 = vmatpush1.msra.mxu0 0.0
    %442 = vmatprep.subr.mxu0 0.0
    %443 = vmatpush1.msra.mxu0 0.0
    %444 = vmatprep.subr.mxu0 0.0
    %445 = vmatpush1.msra.mxu0 0.0
    %446 = vmatprep.subr.mxu0 0.0
    %447 = vmatpush1.msra.mxu0 0.0
    %448 = vmatprep.subr.mxu0 0.0
    %449 = vmatpush1.msra.mxu0 0.0
    %450 = vmatprep.subr.mxu0 0.0
    %451 = vmatpush1.msra.mxu0 0.0
    %452 = vmatprep.subr.mxu0 0.0
    %453 = vmatpush1.msra.mxu0 0.0
    %454 = vmatprep.subr.mxu0 0.0
    %455 = vmatpush1.msra.mxu0 0.0
    %456 = vmatprep.subr.mxu0 0.0
    %457 = vmatpush1.msra.mxu0 0.0
    %458 = vmatprep.subr.mxu0 0.0
    %459 = vmatpush1.msra.mxu0 0.0
    %460 = vmatprep.subr.mxu0 0.0
    %461 = vmatpush1.msra.mxu0 0.0
    %462 = vmatprep.subr.mxu0 0.0
    %463 = vmatpush1.msra.mxu0 0.0
    %464 = vmatprep.subr.mxu0 0.0
    %465 = vmatpush1.msra.mxu0 %v29
    %466 = vmatprep.subr.mxu0 0.0
    %467 = vmatpush1.msra.mxu0 %v28
    %468 = vmatprep.subr.mxu0 0.0
    %469 = vmatpush1.msra.mxu0 %v27
    %470 = vmatprep.subr.mxu0 0.0
    %471 = vmatpush1.msra.mxu0 %v26
    %472 = vmatprep.subr.mxu0 0.0
    %473 = vmatpush2.msra.mxu0 0.0
    %474 = vmatprep.subr.mxu0 0.0
    %475 = vmatpush2.msra.mxu0 0.0
    %476 = vmatprep.subr.mxu0 0.0
    %477 = vmatpush2.msra.mxu0 0.0
    %478 = vmatprep.subr.mxu0 0.0
    %479 = vmatpush2.msra.mxu0 0.0
    %480 = vmatprep.subr.mxu0 0.0
    %481 = vmatpush2.msra.mxu0 0.0
    %482 = vmatprep.subr.mxu0 0.0
    %483 = vmatpush2.msra.mxu0 0.0
    %484 = vmatprep.subr.mxu0 0.0
    %485 = vmatpush2.msra.mxu0 0.0
    %486 = vmatprep.subr.mxu0 0.0
    %487 = vmatpush2.msra.mxu0 0.0
    %488 = vmatprep.subr.mxu0 0.0
    %489 = vmatpush2.msra.mxu0 0.0
    %490 = vmatprep.subr.mxu0 0.0
    %491 = vmatpush2.msra.mxu0 0.0
    %492 = vmatprep.subr.mxu0 0.0
    %493 = vmatpush2.msra.mxu0 0.0
    %494 = vmatprep.subr.mxu0 0.0
    %495 = vmatpush2.msra.mxu0 0.0
    %496 = vmatprep.subr.mxu0 0.0
    %497 = vmatpush2.msra.mxu0 0.0
    %498 = vmatprep.subr.mxu0 0.0
    %499 = vmatpush2.msra.mxu0 0.0
    %500 = vmatprep.subr.mxu0 0.0
    %501 = vmatpush2.msra.mxu0 0.0
    %502 = vmatprep.subr.mxu0 0.0
    %503 = vmatpush2.msra.mxu0 0.0
    %504 = vmatprep.mubr.f32.mxu0 0.0
    %505 = vmatmul.mubr.f32.gmra.mxu0 %v438
    %v506 = vpop.f32.mrf.mxu0
    %v507 = vadd.f32 0.0, %v506
    %v508 = vpop.f32.mrf.mxu0
    %509 = vdwg.mxu0
    %v511 = vrot.slane %v507, 2
    %v513 = vadd.f32 %v115, %v511
    %v514 = vxor.u32 %v513, 2147483648
    %v515 = vmul.f32 %v514, 1.442695
    %v516 = vpow.pop %v515
    %v517 = vadd.f32 %v516, 1.0
    %v518 = vrcp.pop %v517
    %v519 = vmul.f32 1.0, %v518
    %v520 = vtanh.pop %v513
    %v522 = vrot.slane %v427, 6
    %v524 = vmul.f32 %v519, %v522
    %526 = vrot.lane.b32.xlu0 %v520, 64
    %v527 = vpop.permute.xlu0 %526
    %v529 = vmul.f32 %v519, %v527
    %531 = vrot.lane.b32.xlu0 %v529, 32
    %v532 = vpop.permute.xlu0 %531
    %v534 = vadd.f32 %v524, %v532
    %v535 = vtanh.pop %v534
    %537 = vrot.lane.b32.xlu0 %v535, 64
    %v538 = vpop.permute.xlu0 %537
    %v540 = vmul.f32 %v519, %v538
    %v542 = vrot.slane %v540, 6
    %543 = vrot.lane.b32.xlu0 %v542, 32
    %v544 = vpop.permute.xlu0 %543
    %v545 = vsel %vm41, %v544, 0
    %547 = vmatprep.subr.mxu0 0.0
    %548 = vmatpush1.msra.mxu0 0.0
    %549 = vmatprep.subr.mxu0 0.0
    %550 = vmatpush1.msra.mxu0 0.0
    %551 = vmatprep.subr.mxu0 0.0
    %552 = vmatpush1.msra.mxu0 0.0
    %553 = vmatprep.subr.mxu0 0.0
    %554 = vmatpush1.msra.mxu0 0.0
    %555 = vmatprep.subr.mxu0 0.0
    %556 = vmatpush1.msra.mxu0 0.0
    %557 = vmatprep.subr.mxu0 0.0
    %558 = vmatpush1.msra.mxu0 0.0
    %559 = vmatprep.subr.mxu0 0.0
    %560 = vmatpush1.msra.mxu0 0.0
    %561 = vmatprep.subr.mxu0 0.0
    %562 = vmatpush1.msra.mxu0 0.0
    %563 = vmatprep.subr.mxu0 0.0
    %564 = vmatpush1.msra.mxu0 0.0
    %565 = vmatprep.subr.mxu0 0.0
    %566 = vmatpush1.msra.mxu0 0.0
    %567 = vmatprep.subr.mxu0 0.0
    %568 = vmatpush1.msra.mxu0 0.0
    %569 = vmatprep.subr.mxu0 0.0
    %570 = vmatpush1.msra.mxu0 0.0
    %571 = vmatprep.subr.mxu0 0.0
    %572 = vmatpush1.msra.mxu0 %v29
    %573 = vmatprep.subr.mxu0 0.0
    %574 = vmatpush1.msra.mxu0 %v28
    %575 = vmatprep.subr.mxu0 0.0
    %576 = vmatpush1.msra.mxu0 %v27
    %577 = vmatprep.subr.mxu0 0.0
    %578 = vmatpush1.msra.mxu0 %v26
    %579 = vmatprep.subr.mxu0 0.0
    %580 = vmatpush2.msra.mxu0 0.0
    %581 = vmatprep.subr.mxu0 0.0
    %582 = vmatpush2.msra.mxu0 0.0
    %583 = vmatprep.subr.mxu0 0.0
    %584 = vmatpush2.msra.mxu0 0.0
    %585 = vmatprep.subr.mxu0 0.0
    %586 = vmatpush2.msra.mxu0 0.0
    %587 = vmatprep.subr.mxu0 0.0
    %588 = vmatpush2.msra.mxu0 0.0
    %589 = vmatprep.subr.mxu0 0.0
    %590 = vmatpush2.msra.mxu0 0.0
    %591 = vmatprep.subr.mxu0 0.0
    %592 = vmatpush2.msra.mxu0 0.0
    %593 = vmatprep.subr.mxu0 0.0
    %594 = vmatpush2.msra.mxu0 0.0
    %595 = vmatprep.subr.mxu0 0.0
    %596 = vmatpush2.msra.mxu0 0.0
    %597 = vmatprep.subr.mxu0 0.0
    %598 = vmatpush2.msra.mxu0 0.0
    %599 = vmatprep.subr.mxu0 0.0
    %600 = vmatpush2.msra.mxu0 0.0
    %601 = vmatprep.subr.mxu0 0.0
    %602 = vmatpush2.msra.mxu0 0.0
    %603 = vmatprep.subr.mxu0 0.0
    %604 = vmatpush2.msra.mxu0 0.0
    %605 = vmatprep.subr.mxu0 0.0
    %606 = vmatpush2.msra.mxu0 0.0
    %607 = vmatprep.subr.mxu0 0.0
    %608 = vmatpush2.msra.mxu0 0.0
    %609 = vmatprep.subr.mxu0 0.0
    %610 = vmatpush2.msra.mxu0 0.0
    %611 = vmatprep.mubr.f32.mxu0 0.0
    %612 = vmatmul.mubr.f32.gmra.mxu0 %v545
    %v613 = vpop.f32.mrf.mxu0
    %v614 = vadd.f32 0.0, %v613
    %v615 = vpop.f32.mrf.mxu0
    %616 = vdwg.mxu0
    %v617 = vadd.f32 %v120, %v614
    %v618 = vxor.u32 %v617, 2147483648
    %v619 = vmul.f32 %v618, 1.442695
    %v620 = vpow.pop %v619
    %v621 = vadd.f32 %v620, 1.0
    %v622 = vrcp.pop %v621
    %v623 = vmul.f32 1.0, %v622
    %v624 = vtanh.pop %v617
    %v626 = vrot.slane %v534, 6
    %v628 = vmul.f32 %v623, %v626
    %630 = vrot.lane.b32.xlu0 %v624, 64
    %v631 = vpop.permute.xlu0 %630
    %v633 = vmul.f32 %v623, %v631
    %635 = vrot.lane.b32.xlu0 %v633, 32
    %v636 = vpop.permute.xlu0 %635
    %v638 = vadd.f32 %v628, %v636
    %v639 = vtanh.pop %v638
    %641 = vrot.lane.b32.xlu0 %v639, 64
    %v642 = vpop.permute.xlu0 %641
    %v644 = vmul.f32 %v623, %v642
    %646 = vrot.lane.b32.xlu0 %v644, 32
    %v647 = vpop.permute.xlu0 %646
    %v648 = vsel %vm41, %v647, 0
    %650 = vmatprep.subr.mxu0 0.0
    %651 = vmatpush1.msra.mxu0 0.0
    %652 = vmatprep.subr.mxu0 0.0
    %653 = vmatpush1.msra.mxu0 0.0
    %654 = vmatprep.subr.mxu0 0.0
    %655 = vmatpush1.msra.mxu0 0.0
    %656 = vmatprep.subr.mxu0 0.0
    %657 = vmatpush1.msra.mxu0 0.0
    %658 = vmatprep.subr.mxu0 0.0
    %659 = vmatpush1.msra.mxu0 0.0
    %660 = vmatprep.subr.mxu0 0.0
    %661 = vmatpush1.msra.mxu0 0.0
    %662 = vmatprep.subr.mxu0 0.0
    %663 = vmatpush1.msra.mxu0 0.0
    %664 = vmatprep.subr.mxu0 0.0
    %665 = vmatpush1.msra.mxu0 0.0
    %666 = vmatprep.subr.mxu0 0.0
    %667 = vmatpush1.msra.mxu0 0.0
    %668 = vmatprep.subr.mxu0 0.0
    %669 = vmatpush1.msra.mxu0 0.0
    %670 = vmatprep.subr.mxu0 0.0
    %671 = vmatpush1.msra.mxu0 0.0
    %672 = vmatprep.subr.mxu0 0.0
    %673 = vmatpush1.msra.mxu0 0.0
    %674 = vmatprep.subr.mxu0 0.0
    %675 = vmatpush1.msra.mxu0 %v29
    %676 = vmatprep.subr.mxu0 0.0
    %677 = vmatpush1.msra.mxu0 %v28
    %678 = vmatprep.subr.mxu0 0.0
    %679 = vmatpush1.msra.mxu0 %v27
    %680 = vmatprep.subr.mxu0 0.0
    %681 = vmatpush1.msra.mxu0 %v26
    %682 = vmatprep.subr.mxu0 0.0
    %683 = vmatpush2.msra.mxu0 0.0
    %684 = vmatprep.subr.mxu0 0.0
    %685 = vmatpush2.msra.mxu0 0.0
    %686 = vmatprep.subr.mxu0 0.0
    %687 = vmatpush2.msra.mxu0 0.0
    %688 = vmatprep.subr.mxu0 0.0
    %689 = vmatpush2.msra.mxu0 0.0
    %690 = vmatprep.subr.mxu0 0.0
    %691 = vmatpush2.msra.mxu0 0.0
    %692 = vmatprep.subr.mxu0 0.0
    %693 = vmatpush2.msra.mxu0 0.0
    %694 = vmatprep.subr.mxu0 0.0
    %695 = vmatpush2.msra.mxu0 0.0
    %696 = vmatprep.subr.mxu0 0.0
    %697 = vmatpush2.msra.mxu0 0.0
    %698 = vmatprep.subr.mxu0 0.0
    %699 = vmatpush2.msra.mxu0 0.0
    %700 = vmatprep.subr.mxu0 0.0
    %701 = vmatpush2.msra.mxu0 0.0
    %702 = vmatprep.subr.mxu0 0.0
    %703 = vmatpush2.msra.mxu0 0.0
    %704 = vmatprep.subr.mxu0 0.0
    %705 = vmatpush2.msra.mxu0 0.0
    %706 = vmatprep.subr.mxu0 0.0
    %707 = vmatpush2.msra.mxu0 0.0
    %708 = vmatprep.subr.mxu0 0.0
    %709 = vmatpush2.msra.mxu0 0.0
    %710 = vmatprep.subr.mxu0 0.0
    %711 = vmatpush2.msra.mxu0 0.0
    %712 = vmatprep.subr.mxu0 0.0
    %713 = vmatpush2.msra.mxu0 0.0
    %714 = vmatprep.mubr.f32.mxu0 0.0
    %715 = vmatmul.mubr.f32.gmra.mxu0 %v648
    %v716 = vpop.f32.mrf.mxu0
    %v717 = vadd.f32 0.0, %v716
    %v718 = vpop.f32.mrf.mxu0
    %719 = vdwg.mxu0
    %v721 = vrot.slane %v717, 6
    %v723 = vadd.f32 %v120, %v721
    %v724 = vxor.u32 %v723, 2147483648
    %v725 = vmul.f32 %v724, 1.442695
    %v726 = vpow.pop %v725
    %v727 = vadd.f32 %v726, 1.0
    %v728 = vrcp.pop %v727
    %v729 = vmul.f32 1.0, %v728
    %v730 = vtanh.pop %v723
    %v732 = vrot.slane %v638, 6
    %v734 = vmul.f32 %v729, %v732
    %736 = vrot.lane.b32.xlu0 %v730, 64
    %v737 = vpop.permute.xlu0 %736
    %v739 = vmul.f32 %v729, %v737
    %741 = vrot.lane.b32.xlu0 %v739, 32
    %v742 = vpop.permute.xlu0 %741
    %v744 = vadd.f32 %v734, %v742
    %v745 = vtanh.pop %v744
    %747 = vrot.lane.b32.xlu0 %v745, 64
    %v748 = vpop.permute.xlu0 %747
    %v750 = vmul.f32 %v729, %v748
    %v752 = vrot.slane %v750, 2
    %753 = vrot.lane.b32.xlu0 %v752, 32
    %v754 = vpop.permute.xlu0 %753
    %v755 = vsel %vm41, %v754, 0
    %757 = vmatprep.subr.mxu0 0.0
    %758 = vmatpush1.msra.mxu0 0.0
    %759 = vmatprep.subr.mxu0 0.0
    %760 = vmatpush1.msra.mxu0 0.0
    %761 = vmatprep.subr.mxu0 0.0
    %762 = vmatpush1.msra.mxu0 0.0
    %763 = vmatprep.subr.mxu0 0.0
    %764 = vmatpush1.msra.mxu0 0.0
    %765 = vmatprep.subr.mxu0 0.0
    %766 = vmatpush1.msra.mxu0 0.0
    %767 = vmatprep.subr.mxu0 0.0
    %768 = vmatpush1.msra.mxu0 0.0
    %769 = vmatprep.subr.mxu0 0.0
    %770 = vmatpush1.msra.mxu0 0.0
    %771 = vmatprep.subr.mxu0 0.0
    %772 = vmatpush1.msra.mxu0 0.0
    %773 = vmatprep.subr.mxu0 0.0
    %774 = vmatpush1.msra.mxu0 0.0
    %775 = vmatprep.subr.mxu0 0.0
    %776 = vmatpush1.msra.mxu0 0.0
    %777 = vmatprep.subr.mxu0 0.0
    %778 = vmatpush1.msra.mxu0 0.0
    %779 = vmatprep.subr.mxu0 0.0
    %780 = vmatpush1.msra.mxu0 0.0
    %781 = vmatprep.subr.mxu0 0.0
    %782 = vmatpush1.msra.mxu0 %v29
    %783 = vmatprep.subr.mxu0 0.0
    %784 = vmatpush1.msra.mxu0 %v28
    %785 = vmatprep.subr.mxu0 0.0
    %786 = vmatpush1.msra.mxu0 %v27
    %787 = vmatprep.subr.mxu0 0.0
    %788 = vmatpush1.msra.mxu0 %v26
    %789 = vmatprep.subr.mxu0 0.0
    %790 = vmatpush2.msra.mxu0 0.0
    %791 = vmatprep.subr.mxu0 0.0
    %792 = vmatpush2.msra.mxu0 0.0
    %793 = vmatprep.subr.mxu0 0.0
    %794 = vmatpush2.msra.mxu0 0.0
    %795 = vmatprep.subr.mxu0 0.0
    %796 = vmatpush2.msra.mxu0 0.0
    %797 = vmatprep.subr.mxu0 0.0
    %798 = vmatpush2.msra.mxu0 0.0
    %799 = vmatprep.subr.mxu0 0.0
    %800 = vmatpush2.msra.mxu0 0.0
    %801 = vmatprep.subr.mxu0 0.0
    %802 = vmatpush2.msra.mxu0 0.0
    %803 = vmatprep.subr.mxu0 0.0
    %804 = vmatpush2.msra.mxu0 0.0
    %805 = vmatprep.subr.mxu0 0.0
    %806 = vmatpush2.msra.mxu0 0.0
    %807 = vmatprep.subr.mxu0 0.0
    %808 = vmatpush2.msra.mxu0 0.0
    %809 = vmatprep.subr.mxu0 0.0
    %810 = vmatpush2.msra.mxu0 0.0
    %811 = vmatprep.subr.mxu0 0.0
    %812 = vmatpush2.msra.mxu0 0.0
    %813 = vmatprep.subr.mxu0 0.0
    %814 = vmatpush2.msra.mxu0 0.0
    %815 = vmatprep.subr.mxu0 0.0
    %816 = vmatpush2.msra.mxu0 0.0
    %817 = vmatprep.subr.mxu0 0.0
    %818 = vmatpush2.msra.mxu0 0.0
    %819 = vmatprep.subr.mxu0 0.0
    %820 = vmatpush2.msra.mxu0 0.0
    %821 = vmatprep.mubr.f32.mxu0 0.0
    %822 = vmatmul.mubr.f32.gmra.mxu0 %v755
    %v823 = vpop.f32.mrf.mxu0
    %v824 = vadd.f32 0.0, %v823
    %v825 = vpop.f32.mrf.mxu0
    %826 = vdwg.mxu0
    %v828 = vrot.slane %v824, 4
    %v830 = vadd.f32 %v120, %v828
    %v831 = vxor.u32 %v830, 2147483648
    %v832 = vmul.f32 %v831, 1.442695
    %v833 = vpow.pop %v832
    %v834 = vadd.f32 %v833, 1.0
    %v835 = vrcp.pop %v834
    %v836 = vmul.f32 1.0, %v835
    %v837 = vtanh.pop %v830
    %v839 = vrot.slane %v744, 6
    %v841 = vmul.f32 %v836, %v839
    %843 = vrot.lane.b32.xlu0 %v837, 64
    %v844 = vpop.permute.xlu0 %843
    %v846 = vmul.f32 %v836, %v844
    %848 = vrot.lane.b32.xlu0 %v846, 32
    %v849 = vpop.permute.xlu0 %848
    %v851 = vadd.f32 %v841, %v849
    %v852 = vtanh.pop %v851
    %854 = vrot.lane.b32.xlu0 %v852, 64
    %v855 = vpop.permute.xlu0 %854
    %v857 = vmul.f32 %v836, %v855
    %v859 = vrot.slane %v857, 4
    %860 = vrot.lane.b32.xlu0 %v859, 32
    %v861 = vpop.permute.xlu0 %860
    %v862 = vsel %vm41, %v861, 0
    %864 = vmatprep.subr.mxu0 0.0
    %865 = vmatpush1.msra.mxu0 0.0
    %866 = vmatprep.subr.mxu0 0.0
    %867 = vmatpush1.msra.mxu0 0.0
    %868 = vmatprep.subr.mxu0 0.0
    %869 = vmatpush1.msra.mxu0 0.0
    %870 = vmatprep.subr.mxu0 0.0
    %871 = vmatpush1.msra.mxu0 0.0
    %872 = vmatprep.subr.mxu0 0.0
    %873 = vmatpush1.msra.mxu0 0.0
    %874 = vmatprep.subr.mxu0 0.0
    %875 = vmatpush1.msra.mxu0 0.0
    %876 = vmatprep.subr.mxu0 0.0
    %877 = vmatpush1.msra.mxu0 0.0
    %878 = vmatprep.subr.mxu0 0.0
    %879 = vmatpush1.msra.mxu0 0.0
    %880 = vmatprep.subr.mxu0 0.0
    %881 = vmatpush1.msra.mxu0 0.0
    %882 = vmatprep.subr.mxu0 0.0
    %883 = vmatpush1.msra.mxu0 0.0
    %884 = vmatprep.subr.mxu0 0.0
    %885 = vmatpush1.msra.mxu0 0.0
    %886 = vmatprep.subr.mxu0 0.0
    %887 = vmatpush1.msra.mxu0 0.0
    %888 = vmatprep.subr.mxu0 0.0
    %889 = vmatpush1.msra.mxu0 %v29
    %890 = vmatprep.subr.mxu0 0.0
    %891 = vmatpush1.msra.mxu0 %v28
    %892 = vmatprep.subr.mxu0 0.0
    %893 = vmatpush1.msra.mxu0 %v27
    %894 = vmatprep.subr.mxu0 0.0
    %895 = vmatpush1.msra.mxu0 %v26
    %896 = vmatprep.subr.mxu0 0.0
    %897 = vmatpush2.msra.mxu0 0.0
    %898 = vmatprep.subr.mxu0 0.0
    %899 = vmatpush2.msra.mxu0 0.0
    %900 = vmatprep.subr.mxu0 0.0
    %901 = vmatpush2.msra.mxu0 0.0
    %902 = vmatprep.subr.mxu0 0.0
    %903 = vmatpush2.msra.mxu0 0.0
    %904 = vmatprep.subr.mxu0 0.0
    %905 = vmatpush2.msra.mxu0 0.0
    %906 = vmatprep.subr.mxu0 0.0
    %907 = vmatpush2.msra.mxu0 0.0
    %908 = vmatprep.subr.mxu0 0.0
    %909 = vmatpush2.msra.mxu0 0.0
    %910 = vmatprep.subr.mxu0 0.0
    %911 = vmatpush2.msra.mxu0 0.0
    %912 = vmatprep.subr.mxu0 0.0
    %913 = vmatpush2.msra.mxu0 0.0
    %914 = vmatprep.subr.mxu0 0.0
    %915 = vmatpush2.msra.mxu0 0.0
    %916 = vmatprep.subr.mxu0 0.0
    %917 = vmatpush2.msra.mxu0 0.0
    %918 = vmatprep.subr.mxu0 0.0
    %919 = vmatpush2.msra.mxu0 0.0
    %920 = vmatprep.subr.mxu0 0.0
    %921 = vmatpush2.msra.mxu0 0.0
    %922 = vmatprep.subr.mxu0 0.0
    %923 = vmatpush2.msra.mxu0 0.0
    %924 = vmatprep.subr.mxu0 0.0
    %925 = vmatpush2.msra.mxu0 0.0
    %926 = vmatprep.subr.mxu0 0.0
    %927 = vmatpush2.msra.mxu0 0.0
    %928 = vmatprep.mubr.f32.mxu0 0.0
    %929 = vmatmul.mubr.f32.gmra.mxu0 %v862
    %v930 = vpop.f32.mrf.mxu0
    %v931 = vadd.f32 0.0, %v930
    %v932 = vpop.f32.mrf.mxu0
    %933 = vdwg.mxu0
    %v935 = vrot.slane %v931, 2
    %v937 = vadd.f32 %v120, %v935
    %v938 = vxor.u32 %v937, 2147483648
    %v939 = vmul.f32 %v938, 1.442695
    %v940 = vpow.pop %v939
    %v941 = vadd.f32 %v940, 1.0
    %v942 = vrcp.pop %v941
    %v943 = vmul.f32 1.0, %v942
    %v944 = vtanh.pop %v937
    %v946 = vrot.slane %v851, 6
    %v948 = vmul.f32 %v943, %v946
    %950 = vrot.lane.b32.xlu0 %v944, 64
    %v951 = vpop.permute.xlu0 %950
    %v953 = vmul.f32 %v943, %v951
    %955 = vrot.lane.b32.xlu0 %v953, 32
    %v956 = vpop.permute.xlu0 %955
    %v958 = vadd.f32 %v948, %v956
    %v959 = vtanh.pop %v958
    %961 = vrot.lane.b32.xlu0 %v959, 64
    %v962 = vpop.permute.xlu0 %961
    %v964 = vmul.f32 %v943, %v962
    %v965 = vld [vmem:[%s4] sm:$0xff]
    %v966 = vld [vmem:[%s4 + $0x8] sm:$0xff]
    %v967 = vld [vmem:[%s4 + $0x10] sm:$0xff]
    %v968 = vld [vmem:[%s4 + $0x18] sm:$0xff]
    %v969 = vld [vmem:[%s5] sm:$0x1]
    %v971 = vlaneseq
    %v972 = vshrl.u32 %v971, 7
    %v973 = vsub.s32 0, %v972
    %v974 = vrot.slane %v969, %v973
    %v976 = vrot.slane %v25, 6
    %v977 = vsel %vm41, %v976, 0
    %979 = vmatprep.subr.mxu0 0.0
    %980 = vmatpush1.msra.mxu0 0.0
    %981 = vmatprep.subr.mxu0 0.0
    %982 = vmatpush1.msra.mxu0 0.0
    %983 = vmatprep.subr.mxu0 0.0
    %984 = vmatpush1.msra.mxu0 0.0
    %985 = vmatprep.subr.mxu0 0.0
    %986 = vmatpush1.msra.mxu0 0.0
    %987 = vmatprep.subr.mxu0 0.0
    %988 = vmatpush1.msra.mxu0 0.0
    %989 = vmatprep.subr.mxu0 0.0
    %990 = vmatpush1.msra.mxu0 0.0
    %991 = vmatprep.subr.mxu0 0.0
    %992 = vmatpush1.msra.mxu0 0.0
    %993 = vmatprep.subr.mxu0 0.0
    %994 = vmatpush1.msra.mxu0 0.0
    %995 = vmatprep.subr.mxu0 0.0
    %996 = vmatpush1.msra.mxu0 0.0
    %997 = vmatprep.subr.mxu0 0.0
    %998 = vmatpush1.msra.mxu0 0.0
    %999 = vmatprep.subr.mxu0 0.0
    %1000 = vmatpush1.msra.mxu0 0.0
    %1001 = vmatprep.subr.mxu0 0.0
    %1002 = vmatpush1.msra.mxu0 0.0
    %1003 = vmatprep.subr.mxu0 0.0
    %1004 = vmatpush1.msra.mxu0 %v968
    %1005 = vmatprep.subr.mxu0 0.0
    %1006 = vmatpush1.msra.mxu0 %v967
    %1007 = vmatprep.subr.mxu0 0.0
    %1008 = vmatpush1.msra.mxu0 %v966
    %1009 = vmatprep.subr.mxu0 0.0
    %1010 = vmatpush1.msra.mxu0 %v965
    %1011 = vmatprep.subr.mxu0 0.0
    %1012 = vmatpush2.msra.mxu0 0.0
    %1013 = vmatprep.subr.mxu0 0.0
    %1014 = vmatpush2.msra.mxu0 0.0
    %1015 = vmatprep.subr.mxu0 0.0
    %1016 = vmatpush2.msra.mxu0 0.0
    %1017 = vmatprep.subr.mxu0 0.0
    %1018 = vmatpush2.msra.mxu0 0.0
    %1019 = vmatprep.subr.mxu0 0.0
    %1020 = vmatpush2.msra.mxu0 0.0
    %1021 = vmatprep.subr.mxu0 0.0
    %1022 = vmatpush2.msra.mxu0 0.0
    %1023 = vmatprep.subr.mxu0 0.0
    %1024 = vmatpush2.msra.mxu0 0.0
    %1025 = vmatprep.subr.mxu0 0.0
    %1026 = vmatpush2.msra.mxu0 0.0
    %1027 = vmatprep.subr.mxu0 0.0
    %1028 = vmatpush2.msra.mxu0 0.0
    %1029 = vmatprep.subr.mxu0 0.0
    %1030 = vmatpush2.msra.mxu0 0.0
    %1031 = vmatprep.subr.mxu0 0.0
    %1032 = vmatpush2.msra.mxu0 0.0
    %1033 = vmatprep.subr.mxu0 0.0
    %1034 = vmatpush2.msra.mxu0 0.0
    %1035 = vmatprep.subr.mxu0 0.0
    %1036 = vmatpush2.msra.mxu0 0.0
    %1037 = vmatprep.subr.mxu0 0.0
    %1038 = vmatpush2.msra.mxu0 0.0
    %1039 = vmatprep.subr.mxu0 0.0
    %1040 = vmatpush2.msra.mxu0 0.0
    %1041 = vmatprep.subr.mxu0 0.0
    %1042 = vmatpush2.msra.mxu0 0.0
    %1043 = vmatprep.mubr.f32.mxu0 0.0
    %1044 = vmatmul.mubr.f32.gmra.mxu0 %v977
    %v1045 = vpop.f32.mrf.mxu0
    %v1046 = vadd.f32 %v974, %v1045
    %v1047 = vpop.f32.mrf.mxu0
    %1048 = vdwg.mxu0
    %v1049 = vxor.u32 %v1046, 2147483648
    %v1050 = vmul.f32 %v1049, 1.442695
    %v1051 = vpow.pop %v1050
    %v1052 = vadd.f32 %v1051, 1.0
    %v1053 = vrcp.pop %v1052
    %v1054 = vmul.f32 1.0, %v1053
    %v1055 = vtanh.pop %v1046
    %1057 = vrot.lane.b32.xlu0 %v1055, 64
    %v1058 = vpop.permute.xlu0 %1057
    %v1060 = vmul.f32 %v1054, %v1058
    %v1061 = vtanh.pop %v1060
    %1063 = vrot.lane.b32.xlu0 %v1061, 96
    %v1064 = vpop.permute.xlu0 %1063
    %v1066 = vmul.f32 %v1054, %v1064
    %1068 = vrot.lane.b32.xlu0 %v964, 32
    %v1069 = vpop.permute.xlu0 %1068
    %v1072 = vrot.slane %v1066, 2
    %1073 = vrot.lane.b32.xlu0 %v1072, 64
    %v1074 = vpop.permute.xlu0 %1073
    %v1076 = vsel %vm41, %v1069, %v1074
    %vm1077 = vcmask 523270
    %1078 = vst.msk [vmem:[#allocation2 - $0x6] sm:$0xc0] %vm1077, %v1076
    // Predicated region
    $region26: #{_forward_impl.1} parent=1 // pred_check
      _
    $region27: #{_forward_impl.1} parent=1 // pred_check_branch
      %1080 = sbr.rel (0) target = $region29
    $region28: #{_forward_impl.1} parent=1 // pred_region
      %s1082 = ssub.s32 32, 32
      %1083 = vsyncadd [#allocation3], %s1082
      %s1085 = sshll.u32 [#allocation2], 4
      %s1086 = int_to_ptr.vmem [resolvable:$true] %s1085
      %1088 = dma.vmem_to_hbm [thread:$0]  %s1086, 32, %s6, [#allocation3]
    $region29: #{_forward_impl.1} parent=1 // pred_fallthru
      _
    // Predicated region
    $region30: #{_forward_impl.1} parent=1 // pred_check
      _
    $region31: #{_forward_impl.1} parent=1 // pred_check_branch
      %1090 = sbr.rel (0) target = $region33
    $region32: #{_forward_impl.1} parent=1 // pred_region
      %1091 = dma.done [#allocation3], 32
    $region33: #{_forward_impl.1} parent=1 // pred_fallthru
      _
    %1092 = vsyncpa [#allocation3], 1

</llo_original>
